<compile_context>
chip_gen: v7x
topology: tpu7x:2x2x1
jax: 0.10.0
libtpu: 0.0.40
codegen_flags: <defaults>
</compile_context>

<pallas_src>
import functools
import math

import jax
import jax.numpy as jnp
import numpy as np
from jax import lax
from jax.experimental import pallas as pl
from jax.experimental.pallas import tpu as pltpu


def make_positional_encoding(max_len: int, d_model: int) -> jnp.ndarray:
    """Builds the (max_len, 1, d_model) sinusoidal buffer, same math as the module."""
    position = jnp.arange(max_len, dtype=jnp.float32)[:, None]             # (L, 1)
    div_term = jnp.exp(
        jnp.arange(0, d_model, 2, dtype=jnp.float32) * (-math.log(10000.0) / d_model)
    )                                                                      # (D/2,)
    pe = jnp.zeros((max_len, d_model), dtype=jnp.float32)
    pe = pe.at[:, 0::2].set(jnp.sin(position * div_term))
    pe = pe.at[:, 1::2].set(jnp.cos(position * div_term))
    return pe[:, None, :]                                                  # (L, 1, D)


# ----------------------------------------------------------------------------- dropout hash


def _dropout_keep_mask(idx_i32, p: float):
    """Counter-based Bernoulli(1-p) keep mask: lowbias32 hash of the global element index.

    The mix runs in uint32 so right shifts are logical (no masking ops); the keep test is a
    single signed full-word compare against round(p*2^32) - 2^31.
    """
    z = pltpu.bitcast(idx_i32, jnp.uint32)
    z = z ^ (z >> 16)
    z = z * np.uint32(0x7FEB352D)
    z = z ^ (z >> 15)
    z = z * np.uint32(0x846CA68B)
    z = z ^ (z >> 16)
    thresh = int(round(p * 4294967296.0)) - (1 << 31)
    thresh = max(-(1 << 31), min(thresh, (1 << 31) - 1))
    return pltpu.bitcast(z, jnp.int32) >= np.int32(thresh)                 # P(keep) = 1 - p


# ----------------------------------------------------------------------------- kernels


def _pe_dropout_lane_flat_kernel(seed_ref, x_ref, pe_ref, o_ref, *, p: float, train: bool,
                                 batch: int, d_model: int):
    """Small-batch path.  x_ref/o_ref: (T, batch*d_model); pe_ref: (T, d_model)."""
    t = x_ref.shape[0]
    dropout = train and p > 0.0
    if dropout:
        scale = jnp.float32(1.0 / (1.0 - p))
        seed = seed_ref[0]
        row0 = pl.program_id(0) * t
    # TODO(synk): for tiny B, generating pe in-kernel (EUP sin/cos of a seq iota) would remove
    # the pe HBM stream entirely; left out because in-kernel sin lowering is not verified here.
    for b in range(batch):                          # static unroll (batch < 8 on this path)
        cols = slice(b * d_model, (b + 1) * d_model)
        y = x_ref[:, cols] + pe_ref[...]
        if dropout:
            r_idx = lax.broadcasted_iota(jnp.int32, (t, d_model), 0)
            d_idx = lax.broadcasted_iota(jnp.int32, (t, d_model), 1)
            # Global linear index into the (S, B, D) tensor -> mask independent of the tiling.
            idx = (row0 + r_idx) * (batch * d_model) + (b * d_model) + d_idx + seed
            keep = _dropout_keep_mask(idx, p)
            y = jnp.where(keep, y * scale, jnp.float32(0.0))
        o_ref[:, cols] = y.astype(o_ref.dtype)


def _pe_dropout_batch_dense_kernel(seed_ref, x_ref, pe_ref, o_ref, *, p: float, train: bool):
    """Large-batch path (B >= 8, already sublane-dense).  x_ref/o_ref: (T,B,D); pe_ref: (T,1,D)."""
    y = x_ref[...] + pe_ref[...]
    if train and p > 0.0:
        t, b, d = x_ref.shape
        r_idx = lax.broadcasted_iota(jnp.int32, (t, b, d), 0)
        b_idx = lax.broadcasted_iota(jnp.int32, (t, b, d), 1)
        d_idx = lax.broadcasted_iota(jnp.int32, (t, b, d), 2)
        idx = (pl.program_id(0) * t + r_idx) * (b * d) + b_idx * d + d_idx + seed_ref[0]
        keep = _dropout_keep_mask(idx, p)
        y = jnp.where(keep, y * jnp.float32(1.0 / (1.0 - p)), jnp.float32(0.0))
    o_ref[...] = y.astype(o_ref.dtype)


# ----------------------------------------------------------------------------- wrapper


def _round_up(v: int, m: int) -> int:
    return (v + m - 1) // m * m


def _sublane(itemsize: int) -> int:
    return 8 * max(1, 4 // itemsize)               # 8 for f32, 16 for bf16, 32 for int8


def _vmem_capacity_bytes() -> int:
    try:
        return int(pltpu.get_tpu_info().vmem_capacity_bytes)
    except Exception:
        return 64 * 1024 * 1024                    # assume the smallest (v7x per-core) VMEM


def positional_encoding_forward(x, pe, seed, *, p: float = 0.1, train: bool = True,
                                seq_tile: int | None = None):
    """x: (S, B, D) seq-first; pe: (max_len, 1, D) buffer; seed: int32 scalar / (1,) array."""
    S, B, D = x.shape
    assert pe.ndim == 3 and pe.shape[0] >= S and pe.shape[1] == 1 and pe.shape[2] == D
    assert 0.0 <= p < 1.0
    itemsize = jnp.dtype(x.dtype).itemsize
    sub = _sublane(itemsize)
    lane_flat = B < 8          # small batch: fold batch onto the lane axis (no sublane padding)
    # NOTE: D should be a multiple of 128 for full-rate (unmasked) stores; any D is still correct
    # because the lane dim of every block equals the full array dim.

    # Padding-aware, double-buffered working set: 2x x-block + 2x out-block + 2x pe-block.
    def working_set_bytes(t: int) -> int:
        if lane_flat:
            xb = _round_up(t, sub) * _round_up(B * D, 128) * itemsize
        else:
            xb = t * _round_up(B, sub) * _round_up(D, 128) * itemsize
        pb = _round_up(t, 8) * _round_up(D, 128) * 4
        return 4 * xb + 2 * pb

    cap = _vmem_capacity_bytes()
    # <= 40 MiB total double-buffered working set: safe on v7x (64 MiB physical) and gives
    # ~6-8 MiB x blocks (near the measured HBM-roofline knee) on v5e/v6e (128 MiB physical).
    budget = min(cap * 5 // 8, 40 * 1024 * 1024)

    if seq_tile is None:
        cand = [t for t in range(1, S + 1) if S % t == 0 and (t % sub == 0 or t == S)]
        fitting = [t for t in cand if working_set_bytes(t) <= budget]
        seq_tile = fitting[-1] if fitting else cand[0]
    assert S % seq_tile == 0, "seq_tile must divide the sequence length"
    grid = (S // seq_tile,)

    wset = working_set_bytes(seq_tile)
    vmem_limit = int(min(cap * 3 // 4, max(32 * 1024 * 1024, 2 * wset)))

    compiler_params = pltpu.CompilerParams(
        dimension_semantics=("parallel",),
        vmem_limit_bytes=vmem_limit,
    )
    # TODO(synk): on v7x (2 TensorCores) try pltpu.CORE_PARALLEL on the seq axis (or an explicit
    # core_map split) and, if the train path shows up VALU-bound, stream a precomputed index
    # plane instead of the in-kernel iotas.

    seed = jnp.asarray(seed, dtype=jnp.int32).reshape((1,))

    if lane_flat:
        kernel = functools.partial(_pe_dropout_lane_flat_kernel, p=float(p), train=bool(train),
                                   batch=int(B), d_model=int(D))
        out = pl.pallas_call(
            kernel,
            out_shape=jax.ShapeDtypeStruct((S, B * D), x.dtype),
            grid=grid,
            in_specs=[
                pl.BlockSpec(memory_space=pltpu.MemorySpace.SMEM),            # seed scalar
                pl.BlockSpec((seq_tile, B * D), lambda i: (i, 0)),            # x rows (contig.)
                pl.BlockSpec((seq_tile, D), lambda i: (i, 0)),                # pe rows
            ],
            out_specs=pl.BlockSpec((seq_tile, B * D), lambda i: (i, 0)),
            compiler_params=compiler_params,
        )(seed, x.reshape(S, B * D), pe.reshape(pe.shape[0], D))
        return out.reshape(S, B, D)

    kernel = functools.partial(_pe_dropout_batch_dense_kernel, p=float(p), train=bool(train))
    return pl.pallas_call(
        kernel,
        out_shape=jax.ShapeDtypeStruct((S, B, D), x.dtype),
        grid=grid,
        in_specs=[
            pl.BlockSpec(memory_space=pltpu.MemorySpace.SMEM),                # seed scalar
            pl.BlockSpec((seq_tile, B, D), lambda i: (i, 0, 0)),              # x tile
            pl.BlockSpec((seq_tile, 1, D), lambda i: (i, 0, 0)),              # pe rows
        ],
        out_specs=pl.BlockSpec((seq_tile, B, D), lambda i: (i, 0, 0)),
        compiler_params=compiler_params,
    )(seed, x, pe)


# ----------------------------------------------------------------------------- demo / checks


if __name__ == "__main__":
    # Small shapes consistent with the module's forward: (seq, batch, d_model).
    # d_model = 128 keeps the last dim lane-dense (multiple of 128).
    S, B, D = 8, 2, 128
    MAX_LEN = 10000
    P = 0.1

    key = jax.random.PRNGKey(0)
    x = jax.random.normal(key, (S, B, D), dtype=jnp.float32)
    pe = make_positional_encoding(MAX_LEN, D)          # deterministic "buffer"
    seed = jnp.array([0], dtype=jnp.int32)

    # Reference for the deterministic part (eval mode / pre-dropout value).
    y_ref = np.asarray(x) + np.asarray(pe[:S])         # broadcasts to (S, B, D)

    # 1) Eval mode (dropout is identity) — must match x + pe.
    out_eval = jax.block_until_ready(
        positional_encoding_forward(x, pe, seed, p=P, train=False))
    np.testing.assert_allclose(np.asarray(out_eval), y_ref, rtol=1e-6, atol=1e-6)

    # 2) Train mode: kept elements equal (x + pe) / (1 - p); drop fraction ~ p.
    out_train = jax.block_until_ready(
        positional_encoding_forward(x, pe, seed, p=P, train=True))
    out_np = np.asarray(out_train)
    kept = out_np != 0.0
    np.testing.assert_allclose(out_np[kept] * (1.0 - P), y_ref[kept],
                               rtol=1e-5, atol=1e-5)
    drop_frac = 1.0 - kept.mean()
    assert 0.02 < drop_frac < 0.20, f"unexpected drop fraction {drop_frac}"

    print("KERNEL_OK")
</pallas_src>

<mosaic_0001>
module attributes {stable_mosaic.version = 11 : i64} {
  func.func @_pe_dropout_lane_flat_kernel(%arg0: i32, %arg1: memref<1xi32, #tpu.memory_space<smem>>, %arg2: memref<8x256xf32, #tpu.memory_space<vmem>>, %arg3: memref<8x128xf32, #tpu.memory_space<vmem>>, %arg4: memref<8x256xf32, #tpu.memory_space<vmem>>) attributes {dimension_semantics = [#tpu.dimension_semantics<parallel>], iteration_bounds = array<i64: 1>, scalar_prefetch = 0 : i64, scratch_operands = 0 : i64, tpu.core_type = #tpu.core_type<tc>, window_params = [{transform_indices = @transform_0, window_bounds = array<i64: 1>}, {transform_indices = @transform_1, window_bounds = array<i64: 8, 256>}, {transform_indices = @transform_2, window_bounds = array<i64: 8, 128>}, {transform_indices = @transform_3, window_bounds = array<i64: 8, 256>}]} {
    %c0 = arith.constant 0 : index
    %c0_0 = arith.constant 0 : index
    %0 = vector.load %arg2[%c0, %c0_0] : memref<8x256xf32, #tpu.memory_space<vmem>>, vector<8x128xf32>
    %c0_1 = arith.constant 0 : index
    %c0_2 = arith.constant 0 : index
    %1 = vector.load %arg3[%c0_1, %c0_2] : memref<8x128xf32, #tpu.memory_space<vmem>>, vector<8x128xf32>
    %2 = arith.addf %0, %1 : vector<8x128xf32>
    %c0_3 = arith.constant 0 : index
    %c0_4 = arith.constant 0 : index
    %3 = vector.load %arg4[%c0_3, %c0_4] : memref<8x256xf32, #tpu.memory_space<vmem>>, vector<8x128xf32>
    tpu.vector_store %arg4[%c0_3, %c0_4], %2 {strides = array<i32>} : memref<8x256xf32, #tpu.memory_space<vmem>>, vector<8x128xf32>,
    %c0_5 = arith.constant 0 : index
    %c128 = arith.constant 128 : index
    %4 = vector.load %arg2[%c0_5, %c128] : memref<8x256xf32, #tpu.memory_space<vmem>>, vector<8x128xf32>
    %c0_6 = arith.constant 0 : index
    %c0_7 = arith.constant 0 : index
    %5 = vector.load %arg3[%c0_6, %c0_7] : memref<8x128xf32, #tpu.memory_space<vmem>>, vector<8x128xf32>
    %6 = arith.addf %4, %5 : vector<8x128xf32>
    %c0_8 = arith.constant 0 : index
    %c128_9 = arith.constant 128 : index
    %7 = vector.load %arg4[%c0_8, %c128_9] : memref<8x256xf32, #tpu.memory_space<vmem>>, vector<8x128xf32>
    tpu.vector_store %arg4[%c0_8, %c128_9], %6 {strides = array<i32>} : memref<8x256xf32, #tpu.memory_space<vmem>>, vector<8x128xf32>,
    return
  }
  func.func @transform_0(%arg0: i32) -> i32 {
    %c0_i32 = arith.constant 0 : i32
    %c0_i32_0 = arith.constant 0 : i32
    return %c0_i32 : i32
  }
  func.func @transform_1(%arg0: i32) -> (i32, i32) {
    %c0_i32 = arith.constant 0 : i32
    %c0_i32_0 = arith.constant 0 : i32
    return %arg0, %c0_i32 : i32, i32
  }
  func.func @transform_2(%arg0: i32) -> (i32, i32) {
    %c0_i32 = arith.constant 0 : i32
    %c0_i32_0 = arith.constant 0 : i32
    return %arg0, %c0_i32 : i32, i32
  }
  func.func @transform_3(%arg0: i32) -> (i32, i32) {
    %c0_i32 = arith.constant 0 : i32
    %c0_i32_0 = arith.constant 0 : i32
    return %arg0, %c0_i32 : i32, i32
  }
}

</mosaic_0001>

<llo_original>
// kernel: tpu_custom_call.1
$region0: #{tpu_custom_call.1}
  #allocation0 [shape = 'u32[]', space=smem, size = 0x4, offset = 0x4, fixed_abs, tag = 'smem constant byte address 0x4 - core index']
  #allocation1 [shape = 'u32[144,128]{1,0:T(1,128)}', space=vmem, size = 0x12000, scoped, tag = 'internal scratch']
  #allocation2 [shape = 's32[1]{0:T(128)S(6)}', space=smem, size = 0x200, scoped, tag = 'scoped memory for tpu_custom_call.1']
  %s0 = inlined_call_operand.<no memory space> [shape: s32[1], index: 0, kind: input, shape index: {}]
  %s1 = inlined_call_operand.hbm [shape: f32[8,256], index: 1, kind: input, shape index: {}]
  %s2 = inlined_call_operand.hbm [shape: f32[10000,128], index: 2, kind: input, shape index: {}]
  %s3 = inlined_call_operand.hbm [shape: f32[8,256], index: 3, kind: output, shape index: {}]
  %s4 = sld [smem:[#allocation0]]
  $region30: #{tpu_custom_call.1} parent=0
    _
  %s6 = ssub.s32 1, %s4
  %s7 = scalar_select 0, %s6, %s4
  %8 = sst [smem:[#allocation2]] %s0
  $region1: #{tpu_custom_call.1} parent=0
    #allocation3 [shape = 'u8[8192]{0}', space=vmem, size = 0x2000, scoped, tag = 'input window, operand 1, single buffered']
    #allocation4 [shape = 's32[1]{0}', space=sflag, size = 0x4, scoped, tag = 'scoped memory for tpu_custom_call.1']
    #allocation5 [shape = 's32[1]{0}', space=sflag, size = 0x4, scoped, tag = 'scoped memory for tpu_custom_call.1']
    #allocation6 [shape = 'u8[4096]{0}', space=vmem, size = 0x1000, scoped, tag = 'input window, operand 2, single buffered']
    #allocation7 [shape = 's32[1]{0}', space=sflag, size = 0x4, scoped, tag = 'scoped memory for tpu_custom_call.1']
    #allocation8 [shape = 'u8[8192]{0}', space=vmem, size = 0x2000, scoped, tag = 'output window, operand 0, single buffered']
    %9 = vsyncpa [#allocation4], 0
    %10 = vsyncpa [#allocation7], 0
    %11 = vsyncpa [#allocation5], 0
    // Predicated region
    $region2: #{tpu_custom_call.1} parent=1 // pred_check
      _
    $region3: #{tpu_custom_call.1} parent=1 // pred_check_branch
      %13 = sbr.rel (0) target = $region5
    $region4: #{tpu_custom_call.1} parent=1 // pred_region
      _
    $region5: #{tpu_custom_call.1} parent=1 // pred_fallthru
      _
    // Predicated region
    $region6: #{tpu_custom_call.1} parent=1 // pred_check
      _
    $region7: #{tpu_custom_call.1} parent=1 // pred_check_branch
      %15 = sbr.rel (0) target = $region9
    $region8: #{tpu_custom_call.1} parent=1 // pred_region
      %s17 = ssub.s32 256, 256
      %18 = vsyncadd [#allocation4], %s17
      %s20 = sshll.u32 [#allocation3], 4
      %s21 = int_to_ptr.vmem [resolvable:$true] %s20
      %23 = dma.hbm_to_vmem [thread:$0]  %s1, 256, %s21, [#allocation4]
    $region9: #{tpu_custom_call.1} parent=1 // pred_fallthru
      _
    // Predicated region
    $region10: #{tpu_custom_call.1} parent=1 // pred_check
      _
    $region11: #{tpu_custom_call.1} parent=1 // pred_check_branch
      %25 = sbr.rel (0) target = $region13
    $region12: #{tpu_custom_call.1} parent=1 // pred_region
      %s27 = ssub.s32 128, 128
      %28 = vsyncadd [#allocation7], %s27
      %s30 = sshll.u32 [#allocation6], 4
      %s31 = int_to_ptr.vmem [resolvable:$true] %s30
      %33 = dma.hbm_to_vmem [thread:$0]  %s2, 128, %s31, [#allocation7]
    $region13: #{tpu_custom_call.1} parent=1 // pred_fallthru
      _
    // Predicated region
    $region14: #{tpu_custom_call.1} parent=1 // pred_check
      _
    $region15: #{tpu_custom_call.1} parent=1 // pred_check_branch
      %35 = sbr.rel (0) target = $region17
    $region16: #{tpu_custom_call.1} parent=1 // pred_region
      %36 = dma.done [#allocation4], 256
    $region17: #{tpu_custom_call.1} parent=1 // pred_fallthru
      _
    // Predicated region
    $region18: #{tpu_custom_call.1} parent=1 // pred_check
      _
    $region19: #{tpu_custom_call.1} parent=1 // pred_check_branch
      %38 = sbr.rel (0) target = $region21
    $region20: #{tpu_custom_call.1} parent=1 // pred_region
      %39 = dma.done [#allocation7], 128
    $region21: #{tpu_custom_call.1} parent=1 // pred_fallthru
      _
    %v40 = vld [vmem:[#allocation3] sm:$0xff]
    %v41 = vld [vmem:[#allocation6] sm:$0xff]
    %v42 = vadd.f32 %v40, %v41
    %43 = vst [vmem:[#allocation8] sm:$0xff] %v42
    %v44 = vld [vmem:[#allocation3 + $0x8] sm:$0xff]
    %v45 = vld [vmem:[#allocation6] sm:$0xff]
    %v46 = vadd.f32 %v44, %v45
    %47 = vst [vmem:[#allocation8 + $0x8] sm:$0xff] %v46
    // Predicated region
    $region22: #{tpu_custom_call.1} parent=1 // pred_check
      _
    $region23: #{tpu_custom_call.1} parent=1 // pred_check_branch
      %49 = sbr.rel (0) target = $region25
    $region24: #{tpu_custom_call.1} parent=1 // pred_region
      %s51 = ssub.s32 256, 256
      %52 = vsyncadd [#allocation5], %s51
      %s54 = sshll.u32 [#allocation8], 4
      %s55 = int_to_ptr.vmem [resolvable:$true] %s54
      %57 = dma.vmem_to_hbm [thread:$0]  %s55, 256, %s3, [#allocation5]
    $region25: #{tpu_custom_call.1} parent=1 // pred_fallthru
      _
    // Predicated region
    $region26: #{tpu_custom_call.1} parent=1 // pred_check
      _
    $region27: #{tpu_custom_call.1} parent=1 // pred_check_branch
      %59 = sbr.rel (0) target = $region29
    $region28: #{tpu_custom_call.1} parent=1 // pred_region
      %60 = dma.done [#allocation5], 256
    $region29: #{tpu_custom_call.1} parent=1 // pred_fallthru
      _
    %61 = vsyncpa [#allocation4], 1
    %62 = vsyncpa [#allocation7], 1
    %63 = vsyncpa [#allocation5], 1

</llo_original>
